<compile_context>
chip_gen: v6e
topology: v6e:2x2x1
jax: 0.10.0
libtpu: 0.0.40
codegen_flags: <defaults>
</compile_context>

<pallas_src>
import functools

import jax
import jax.numpy as jnp
from jax.experimental import pallas as pl
from jax.experimental.pallas import tpu as pltpu

# Module defaults (from CollapseDetector.__init__).
ENTROPY_THRESHOLD = 0.85
ALIGNMENT_THRESHOLD = 0.15
CONDUCTANCE_FLOOR = 0.25


# --------------------------------------------------------------------------
# Kernel: per-row entropy trigger from log_sigma only.
# --------------------------------------------------------------------------
def _entropy_trigger_kernel(log_sigma_ref, out_ref, *, sum_threshold):
    x = log_sigma_ref[...]                      # [tile_b, D]
    if x.dtype == jnp.bfloat16:
        # bf16 abs/exp: 2x packed VPU/EUP throughput on v6e/v7x (Mosaic
        # upcasts internally on v5e, so this is never worse there).
        e = jnp.exp(jnp.abs(x))
        ent_sum = jnp.sum(e, axis=-1, keepdims=True, dtype=jnp.float32)
    else:
        xf = x.astype(jnp.float32)
        ent_sum = jnp.sum(jnp.exp(jnp.abs(xf)), axis=-1, keepdims=True)
    # mean(exp|x|) > thr  <=>  sum(exp|x|) > thr * D  (mean folded into thr).
    # TODO(synk): for D <= ~128 a lane-dense (sublane->lane repacked) output
    # slab would avoid 1/128-utilization masked stores; negligible for large D.
    out_ref[...] = (ent_sum > sum_threshold).astype(jnp.float32)


# --------------------------------------------------------------------------
# VMEM budgeting.
# --------------------------------------------------------------------------
def _vmem_limit_bytes():
    """Per-generation VMEM budget with ~25% headroom (48 MiB v7x, 96 MiB v5e/v6e)."""
    cap = 64 * 1024 * 1024  # conservative fallback = v7x per-TC physical VMEM
    try:
        info = pltpu.get_tpu_info()
        cap = int(getattr(info, "vmem_capacity_bytes", cap))
    except Exception:
        pass
    return min((cap * 3) // 4, 100 * 1024 * 1024)


def _pick_tile_b(b, d, itemsize, vmem_limit_bytes):
    """Largest batch tile whose *total resident* VMEM fits the budget.

    Per row of tile: 2 * D * itemsize   (double-buffered log_sigma tile)
                   + 2 * 128 * 4        (double-buffered [*,1] f32 output,
                                          padded to 128 lanes in VMEM).
    """
    sublane = 8 * max(1, 4 // itemsize)          # f32 -> 8, bf16 -> 16
    budget = max(vmem_limit_bytes - 4 * 1024 * 1024, 1024 * 1024)  # scratch headroom
    per_row = 2 * d * itemsize + 2 * 128 * 4
    tile = max(sublane, (budget // per_row) // sublane * sublane)
    # If tile >= B we use the full batch (block == full dim, any B allowed);
    # otherwise tile is a multiple of the sublane count, satisfying the (8,128)
    # block constraint, and the ragged last block handles B % tile != 0.
    return min(tile, b)


def _entropy_trigger_pallas(log_sigma, entropy_threshold):
    B, D = log_sigma.shape
    itemsize = jnp.dtype(log_sigma.dtype).itemsize
    vmem_limit = _vmem_limit_bytes()
    tile_b = _pick_tile_b(B, D, itemsize, vmem_limit)
    num_tiles = pl.cdiv(B, tile_b)

    kernel = functools.partial(
        _entropy_trigger_kernel, sum_threshold=float(entropy_threshold) * D)

    cost = pl.CostEstimate(
        flops=2 * B * D,            # abs + reduce-add
        transcendentals=B * D,      # exp
        bytes_accessed=B * D * itemsize + B * 4,
    )

    return pl.pallas_call(
        kernel,
        out_shape=jax.ShapeDtypeStruct((B, 1), jnp.float32),
        grid=(num_tiles,),
        in_specs=[pl.BlockSpec((tile_b, D), lambda i: (i, 0))],
        out_specs=pl.BlockSpec((tile_b, 1), lambda i: (i, 0)),
        compiler_params=pltpu.CompilerParams(
            # "parallel": shard row tiles across v7x's 2 TCs; no-op on v5e/v6e.
            dimension_semantics=("parallel",),
            vmem_limit_bytes=vmem_limit,
        ),
        cost_estimate=cost,
    )(log_sigma)


# --------------------------------------------------------------------------
# Module forward.
# --------------------------------------------------------------------------
def collapse_detector(log_sigma, alignment, conductance,
                      entropy_threshold=ENTROPY_THRESHOLD,
                      alignment_threshold=ALIGNMENT_THRESHOLD,
                      conductance_floor=CONDUCTANCE_FLOOR):
    """Pallas TPU implementation of CollapseDetector.forward.

    Args:
      log_sigma:   [B, D] float32 or bfloat16
      alignment:   [B, 1]
      conductance: [B, 1]
    Returns:
      collapse_score: [B, 1] float32
    """
    B, D = log_sigma.shape
    alignment = alignment.astype(jnp.float32)
    conductance = conductance.astype(jnp.float32)

    # Trivial O(B) side-channel triggers stay in XLA (their [*,1] blocks would
    # be padded to 128 lanes in VMEM and distort the kernel's tile budget).
    alignment_trigger = (alignment < alignment_threshold).astype(jnp.float32)
    conductance_trigger = (conductance < conductance_floor).astype(jnp.float32)

    if float(entropy_threshold) < 1.0:
        # exp(|x|) >= 1 for all finite x, so mean(exp|x|) >= 1 > threshold:
        # the entropy trigger is identically 1 and the whole B*D HBM stream
        # is dead.  Resolved at trace time (threshold is a Python float).
        entropy_trigger = jnp.ones((B, 1), jnp.float32)
    else:
        entropy_trigger = _entropy_trigger_pallas(log_sigma, entropy_threshold)

    score = (0.4 * entropy_trigger
             + 0.3 * alignment_trigger
             + 0.3 * conductance_trigger)
    # clamp(0, 1) kept for exact module semantics (0.4+0.3+0.3 rounds to
    # slightly above 1.0 in f32).
    return jnp.clip(score, 0.0, 1.0)


# --------------------------------------------------------------------------
# Pure-JAX reference (mirrors the PyTorch forward).
# --------------------------------------------------------------------------
def _reference(log_sigma, alignment, conductance,
               entropy_threshold, alignment_threshold, conductance_floor):
    entropy_energy = jnp.mean(jnp.exp(jnp.abs(log_sigma.astype(jnp.float32))),
                              axis=-1, keepdims=True)
    entropy_trigger = (entropy_energy > entropy_threshold).astype(jnp.float32)
    alignment_trigger = (alignment < alignment_threshold).astype(jnp.float32)
    conductance_trigger = (conductance < conductance_floor).astype(jnp.float32)
    return jnp.clip(
        0.4 * entropy_trigger + 0.3 * alignment_trigger + 0.3 * conductance_trigger,
        0.0, 1.0,
    )


if __name__ == "__main__":
    key = jax.random.PRNGKey(0)
    k1, k2, k3 = jax.random.split(key, 3)

    B, D = 8, 32
    log_sigma = jax.random.normal(k1, (B, D), dtype=jnp.float32) * 0.5
    alignment = jax.random.uniform(k2, (B, 1), dtype=jnp.float32)
    conductance = jax.random.uniform(k3, (B, 1), dtype=jnp.float32)

    # 1) Default thresholds: trace-time fast path (entropy trigger == 1, no
    #    kernel, no B*D HBM traffic).
    out_fast = jax.block_until_ready(
        collapse_detector(log_sigma, alignment, conductance))
    ref_fast = _reference(log_sigma, alignment, conductance,
                          ENTROPY_THRESHOLD, ALIGNMENT_THRESHOLD, CONDUCTANCE_FLOOR)
    assert out_fast.shape == (B, 1), out_fast.shape
    assert jnp.allclose(out_fast, ref_fast, atol=1e-6), (out_fast, ref_fast)

    # 2) entropy_threshold >= 1.0: exercises the Pallas kernel path with a
    #    data-dependent entropy trigger.
    thr = 1.55
    out_kernel = jax.block_until_ready(
        collapse_detector(log_sigma, alignment, conductance,
                          entropy_threshold=thr))
    ref_kernel = _reference(log_sigma, alignment, conductance,
                            thr, ALIGNMENT_THRESHOLD, CONDUCTANCE_FLOOR)
    assert out_kernel.shape == (B, 1), out_kernel.shape
    assert jnp.allclose(out_kernel, ref_kernel, atol=1e-6), (out_kernel, ref_kernel)

    print("KERNEL_OK")
</pallas_src>

<mosaic_0001>
module attributes {stable_mosaic.version = 11 : i64} {
  func.func @_entropy_trigger_kernel(%arg0: i32, %arg1: memref<8x32xf32, #tpu.memory_space<vmem>>, %arg2: memref<8x1xf32, #tpu.memory_space<vmem>>) attributes {dimension_semantics = [#tpu.dimension_semantics<parallel>], iteration_bounds = array<i64: 1>, scalar_prefetch = 0 : i64, scratch_operands = 0 : i64, tpu.core_type = #tpu.core_type<tc>, window_params = [{transform_indices = @transform_0, window_bounds = array<i64: 8, 32>}, {transform_indices = @transform_1, window_bounds = array<i64: 8, 1>}]} {
    %c0 = arith.constant 0 : index
    %c0_0 = arith.constant 0 : index
    %0 = vector.load %arg1[%c0, %c0_0] : memref<8x32xf32, #tpu.memory_space<vmem>>, vector<8x32xf32>
    %1 = math.absf %0 : vector<8x32xf32>
    %2 = math.exp %1 : vector<8x32xf32>
    %cst = arith.constant dense<0.000000e+00> : vector<8xf32>
    %3 = vector.multi_reduction <add>, %2, %cst [1] : vector<8x32xf32> to vector<8xf32>
    %4 = vector.shape_cast %3 : vector<8xf32> to vector<8x1xf32>
    %cst_1 = arith.constant 4.960000e+01 : f32
    %5 = vector.broadcast %cst_1 : f32 to vector<8x1xf32>
    %6 = arith.cmpf ogt, %4, %5 : vector<8x1xf32>
    %7 = arith.extui %6 : vector<8x1xi1> to vector<8x1xi32>
    %8 = arith.sitofp %7 : vector<8x1xi32> to vector<8x1xf32>
    %c0_2 = arith.constant 0 : index
    %c0_3 = arith.constant 0 : index
    %9 = vector.load %arg2[%c0_2, %c0_3] : memref<8x1xf32, #tpu.memory_space<vmem>>, vector<8x1xf32>
    tpu.vector_store %arg2[%c0_2, %c0_3], %8 {strides = array<i32>} : memref<8x1xf32, #tpu.memory_space<vmem>>, vector<8x1xf32>,
    return
  }
  func.func @transform_0(%arg0: i32) -> (i32, i32) {
    %c0_i32 = arith.constant 0 : i32
    %c0_i32_0 = arith.constant 0 : i32
    return %arg0, %c0_i32 : i32, i32
  }
  func.func @transform_1(%arg0: i32) -> (i32, i32) {
    %c0_i32 = arith.constant 0 : i32
    %c0_i32_0 = arith.constant 0 : i32
    return %arg0, %c0_i32 : i32, i32
  }
}

</mosaic_0001>

<llo_original>
// kernel: tpu_custom_call.1
$region0: #{tpu_custom_call.1}
  #allocation0 [shape = 'u32[]', space=smem, size = 0x4, offset = 0x4, fixed_abs, tag = 'smem constant byte address 0x4 - core index']
  #allocation1 [shape = 'u32[144,128]{1,0:T(1,128)}', space=vmem, size = 0x12000, scoped, tag = 'internal scratch']
  %s0 = inlined_call_operand.hbm [shape: f32[8,32], index: 0, kind: input, shape index: {}]
  %s1 = inlined_call_operand.vmem [shape: f32[8,1], index: 1, kind: output, shape index: {}]
  %s2 = sld [smem:[#allocation0]]
  $region18: #{tpu_custom_call.1} parent=0
    _
  %s4 = ssub.s32 1, %s2
  %s5 = scalar_select 0, %s4, %s2
  $region1: #{tpu_custom_call.1} parent=0
    #allocation2 [shape = 'u8[4096]{0}', space=vmem, size = 0x1000, scoped, tag = 'input window, operand 0, single buffered']
    #allocation3 [shape = 's32[1]{0}', space=sflag, size = 0x4, scoped, tag = 'scoped memory for tpu_custom_call.1']
    %6 = vsyncpa [#allocation3], 0
    // Predicated region
    $region2: #{tpu_custom_call.1} parent=1 // pred_check
      _
    $region3: #{tpu_custom_call.1} parent=1 // pred_check_branch
      %8 = sbr.rel (0) target = $region5
    $region4: #{tpu_custom_call.1} parent=1 // pred_region
      %s10 = ssub.s32 128, 128
      %11 = vsyncadd [#allocation3], %s10
      %s13 = sshll.u32 [#allocation2], 4
      %s14 = int_to_ptr.vmem [resolvable:$true] %s13
      %16 = dma.hbm_to_vmem [thread:$0]  %s0, 128, %s14, [#allocation3]
    $region5: #{tpu_custom_call.1} parent=1 // pred_fallthru
      _
    // Predicated region
    $region6: #{tpu_custom_call.1} parent=1 // pred_check
      _
    $region7: #{tpu_custom_call.1} parent=1 // pred_check_branch
      %18 = sbr.rel (0) target = $region9
    $region8: #{tpu_custom_call.1} parent=1 // pred_region
      %19 = dma.done [#allocation3], 128
    $region9: #{tpu_custom_call.1} parent=1 // pred_fallthru
      _
    %v20 = vld [vmem:[#allocation2] sm:$0xff]
    %v21 = vand.u32 2147483647, %v20
    %v22 = vmul.f32 %v21, 1.442695
    %v23 = vpow.pop %v22
    %vm24 = vcmask 261120
    %v25 = vsel %vm24, %v23, 0.0
    %26 = vadd.xlane.f32.xlu0 %v25
    %v27 = vpop.xlane.xlu0 %26
    %vm28 = vcmp.gt.f32.partialorder %v27, 49.6
    %v29 = vsel %vm28, 1, 0
    %v30 = vcvt.s32.f32 %v29
    %vm31 = vcmask 7168
    %32 = vst.msk [vmem:[%s1] sm:$0xff] %vm31, %v30
    // Predicated region
    $region10: #{tpu_custom_call.1} parent=1 // pred_check
      _
    $region11: #{tpu_custom_call.1} parent=1 // pred_check_branch
      %34 = sbr.rel (0) target = $region13
    $region12: #{tpu_custom_call.1} parent=1 // pred_region
      _
    $region13: #{tpu_custom_call.1} parent=1 // pred_fallthru
      _
    // Predicated region
    $region14: #{tpu_custom_call.1} parent=1 // pred_check
      _
    $region15: #{tpu_custom_call.1} parent=1 // pred_check_branch
      %36 = sbr.rel (0) target = $region17
    $region16: #{tpu_custom_call.1} parent=1 // pred_region
      _
    $region17: #{tpu_custom_call.1} parent=1 // pred_fallthru
      _
    %37 = vsyncpa [#allocation3], 1

</llo_original>
